<compile_context>
chip_gen: v5e
topology: v5e:2x2
jax: 0.10.0
libtpu: 0.0.40
codegen_flags: <defaults>
</compile_context>

<pallas_src>
import jax
import jax.numpy as jnp
from jax.experimental import pallas as pl
from jax.experimental.pallas import tpu as pltpu


def _round_up(x, m):
    return ((x + m - 1) // m) * m


def _round_down(x, m):
    return (x // m) * m


def _sublane_pack(itemsize):
    # Native sublane packing per dtype width (f32: 8, bf16: 16, int8/fp8: 32).
    return {4: 8, 2: 16, 1: 32}.get(itemsize, 8)


def _vmem_caps(requested):
    """Return (budget_bytes, hard_cap_bytes) for the current chip."""
    cap = 64 * 1024 * 1024                       # conservative default (v7x per-TC)
    try:
        info = pltpu.get_tpu_info()
        cap = int(getattr(info, "vmem_capacity_bytes", cap) or cap)
    except Exception:
        pass
    cap = min(cap, 128 * 1024 * 1024)
    hard = max(cap - 8 * 1024 * 1024, 16 * 1024 * 1024)   # headroom for Pallas internals
    if requested is not None:
        return min(int(requested), hard), hard
    return min(int(cap * 3 // 4), hard), hard


def _spec(shape, index_map, buffers=None):
    """BlockSpec with optional explicit buffer count (graceful fallback)."""
    if buffers is not None:
        try:
            return pl.BlockSpec(shape, index_map, pipeline_mode=pl.Buffered(buffers))
        except Exception:       # older jax without pipeline_mode / Buffered
            pass
    return pl.BlockSpec(shape, index_map)


def _build_ffn_kernel(*, single_h, out_is_f32, ragged_h, th, H):
    def kernel(x_ref, w1_ref, b1_ref, w2_ref, b2_ref, o_ref, *scratch):
        h_idx = pl.program_id(1)

        # First matmul on this H-chunk, f32 accumulation on the MXU.
        h = jnp.dot(x_ref[...], w1_ref[...], preferred_element_type=jnp.float32)
        h = h + b1_ref[...].astype(jnp.float32)
        h = jnp.maximum(h, 0.0)                      # ReLU (separable per H-chunk)

        w2 = w2_ref[...]
        if ragged_h:
            # Last H chunk is ragged: zero the padded tail of the activations
            # and of the W2 rows so garbage in the padded region cannot
            # contaminate the accumulator.
            col = jax.lax.broadcasted_iota(jnp.int32, h.shape, 1)
            h = jnp.where(h_idx * th + col < H, h, 0.0)
            row = jax.lax.broadcasted_iota(jnp.int32, w2.shape, 0)
            w2 = jnp.where(h_idx * th + row < H, w2, jnp.zeros_like(w2))

        partial = jnp.dot(h.astype(w2.dtype), w2, preferred_element_type=jnp.float32)

        if single_h:
            # Whole hidden dim in one shot: no accumulator needed at all.
            o_ref[...] = (partial + b2_ref[...].astype(jnp.float32)).astype(o_ref.dtype)
            return

        acc_ref = o_ref if out_is_f32 else scratch[0]

        @pl.when(h_idx == 0)
        def _init():
            acc_ref[...] = jnp.zeros_like(acc_ref)

        acc_ref[...] += partial

        @pl.when(h_idx == pl.num_programs(1) - 1)
        def _finalize():
            o_ref[...] = (acc_ref[...] + b2_ref[...].astype(jnp.float32)).astype(o_ref.dtype)

    return kernel


def ffn_forward(x, w1, b1, w2, b2, *, compute_dtype=jnp.bfloat16, tm=None, th=None,
                vmem_limit_bytes=None):
    """Fused Linear -> ReLU -> Linear.  x: (..., E) -> (..., E).

    w1: (E, H), b1: (H,), w2: (H, E), b2: (E,).
    compute_dtype: dtype fed to the MXU (default bf16; accumulation stays f32).
    """
    E = x.shape[-1]
    H = w1.shape[1]
    lead = x.shape[:-1]
    out_dtype = x.dtype
    out_is_f32 = (jnp.dtype(out_dtype) == jnp.dtype(jnp.float32))

    if compute_dtype is not None:
        compute_dtype = jnp.dtype(compute_dtype)
        if x.dtype != compute_dtype:
            x = x.astype(compute_dtype)
        w1 = w1.astype(compute_dtype)
        w2 = w2.astype(compute_dtype)
    # Biases stay in their original (typically f32) dtype; added in f32 in-kernel.

    x2 = x.reshape(-1, E)
    M = x2.shape[0]

    cs = jnp.dtype(x2.dtype).itemsize            # matmul-input itemsize
    os_ = jnp.dtype(out_dtype).itemsize
    bs = jnp.dtype(b1.dtype).itemsize
    pack = _sublane_pack(cs)

    budget, hard_cap = _vmem_caps(vmem_limit_bytes)

    # ---- hidden (reduction) tile -------------------------------------------
    # Resident-weight fast path: keep the full (E,H)/(H,E) weights in VMEM so
    # they are fetched from HBM exactly once for the whole kernel.
    per_row_resident = 2 * E * (cs + os_)                   # x + out (double-buffered)
    fixed_resident = 2 * E * H * cs + (H + E) * bs          # W1+W2+biases, single-buffered
    resident_fits = fixed_resident + pack * per_row_resident <= budget

    if th is not None:
        th_eff = min(int(th), H)
    elif resident_fits or H <= 128:
        th_eff = H
    else:
        # Streamed weights: th must be a lane-aligned multiple of 128.
        per_row_streamed = E * cs + 2 * E * os_ + (0 if out_is_f32 else 4 * E)
        th_eff = max(128, min(512, _round_down(H, 128)))
        while th_eff > 128 and (4 * E * th_eff * cs + 2 * th_eff * bs + E * bs
                                + pack * per_row_streamed) > budget:
            th_eff -= 128

    single_h = (th_eff == H)
    ragged_h = (H % th_eff) != 0
    num_h = pl.cdiv(H, th_eff)

    # ---- per-grid-step VMEM footprint (bytes) --------------------------------
    if single_h:
        fixed = fixed_resident
        per_row = per_row_resident
    else:
        fixed = 4 * E * th_eff * cs + 2 * th_eff * bs + E * bs   # W1/W2 double-buffered
        per_row = E * cs + 2 * E * os_ + (0 if out_is_f32 else 4 * E)

    # ---- row tile -------------------------------------------------------------
    if M <= pack:
        tm_eff = M                                   # single (full-extent) block
    else:
        tm_cap = _round_down(M, pack)                # never exceed the array extent
        if tm is not None:
            tm_eff = max(pack, min(_round_down(int(tm), pack), tm_cap))
        else:
            avail = max(budget - fixed, 0)
            tm_budget = _round_down(avail // max(per_row, 1), pack)
            tm_eff = max(pack, min(512, tm_cap, tm_budget))
            if single_h and M > 2 * pack:
                # Weights are resident, so splitting M is free: keep >= 2 row
                # tiles so the "parallel" axis can be megacore-sharded (v7x).
                tm_eff = max(pack, min(tm_eff, _round_up(pl.cdiv(M, 2), pack)))
    num_m = pl.cdiv(M, tm_eff)

    footprint = fixed + tm_eff * per_row
    vmem_limit = int(min(hard_cap, max(budget, footprint + 2 * 1024 * 1024)))

    b1_2d = b1.reshape(1, H)
    b2_2d = b2.reshape(1, E)

    # ---- specs ---------------------------------------------------------------
    if single_h:
        # Weight block indices are constant over the whole grid: one HBM fetch,
        # one VMEM buffer each.  x / out are the streamed operands.
        x_spec = _spec((tm_eff, E), lambda i, h: (i, 0))
        w1_spec = _spec((E, th_eff), lambda i, h: (0, h), buffers=1)
        b1_spec = _spec((1, th_eff), lambda i, h: (0, h), buffers=1)
        w2_spec = _spec((th_eff, E), lambda i, h: (h, 0), buffers=1)
        b2_spec = _spec((1, E), lambda i, h: (0, 0), buffers=1)
    else:
        # Weights stream along h (double-buffered); x / b2 only change at
        # M-tile boundaries, so one buffer each is enough.
        x_spec = _spec((tm_eff, E), lambda i, h: (i, 0), buffers=1)
        w1_spec = _spec((E, th_eff), lambda i, h: (0, h))
        b1_spec = _spec((1, th_eff), lambda i, h: (0, h))
        w2_spec = _spec((th_eff, E), lambda i, h: (h, 0))
        b2_spec = _spec((1, E), lambda i, h: (0, 0), buffers=1)
    out_spec = pl.BlockSpec((tm_eff, E), lambda i, h: (i, 0))

    scratch_shapes = []
    if not single_h and not out_is_f32:
        scratch_shapes.append(pltpu.VMEM((tm_eff, E), jnp.float32))

    kernel = _build_ffn_kernel(single_h=single_h, out_is_f32=out_is_f32,
                               ragged_h=ragged_h, th=th_eff, H=H)

    flops = 4 * M * E * H                                 # two matmuls
    w_reads = 1 if single_h else num_m                    # W1/W2 HBM traffic
    cost = pl.CostEstimate(
        flops=flops, transcendentals=0,
        bytes_accessed=int(cs * x2.size + os_ * M * E
                           + w_reads * cs * (w1.size + w2.size)
                           + bs * (b1.size + b2.size)))

    out = pl.pallas_call(
        kernel,
        out_shape=jax.ShapeDtypeStruct((M, E), out_dtype),
        grid_spec=pltpu.PrefetchScalarGridSpec(
            num_scalar_prefetch=0,
            grid=(num_m, num_h),
            in_specs=[x_spec, w1_spec, b1_spec, w2_spec, b2_spec],
            out_specs=out_spec,
            scratch_shapes=scratch_shapes,
        ),
        compiler_params=pltpu.CompilerParams(
            dimension_semantics=("parallel", "arbitrary"),
            vmem_limit_bytes=vmem_limit),
        cost_estimate=cost,
    )(x2, w1, b1_2d, w2, b2_2d)

    return out.reshape(*lead, E)


def init_ffn_params(key, embedding_size, hidden_size, dtype=jnp.float32):
    """Deterministic init mirroring torch.nn.Linear default (uniform +/- 1/sqrt(fan_in))."""
    k1, k2, k3, k4 = jax.random.split(key, 4)
    bound1 = 1.0 / jnp.sqrt(embedding_size)
    bound2 = 1.0 / jnp.sqrt(hidden_size)
    # Stored pre-transposed relative to torch ((in, out)) so the kernel does x @ W.
    w1 = jax.random.uniform(k1, (embedding_size, hidden_size), dtype,
                            minval=-bound1, maxval=bound1)
    b1 = jax.random.uniform(k2, (hidden_size,), dtype, minval=-bound1, maxval=bound1)
    w2 = jax.random.uniform(k3, (hidden_size, embedding_size), dtype,
                            minval=-bound2, maxval=bound2)
    b2 = jax.random.uniform(k4, (embedding_size,), dtype, minval=-bound2, maxval=bound2)
    return w1, b1, w2, b2


if __name__ == "__main__":
    key = jax.random.PRNGKey(0)
    k_x, k_p, k_p2 = jax.random.split(key, 3)

    batch, seq, embedding_size, hidden_size = 2, 8, 32, 64
    x = jax.random.normal(k_x, (batch, seq, embedding_size), dtype=jnp.float32)
    w1, b1, w2, b2 = init_ffn_params(k_p, embedding_size, hidden_size)
    ref = jnp.maximum(x @ w1 + b1, 0.0) @ w2 + b2

    # 1) Default path: bf16 MXU compute, f32 accumulation, resident weights.
    out = jax.block_until_ready(ffn_forward(x, w1, b1, w2, b2))
    assert out.shape == x.shape and out.dtype == x.dtype
    assert jnp.allclose(out, ref, atol=3e-2, rtol=3e-2)

    # 2) Exact f32 compute path.
    out32 = jax.block_until_ready(
        ffn_forward(x, w1, b1, w2, b2, compute_dtype=jnp.float32))
    assert jnp.allclose(out32, ref, atol=1e-5, rtol=1e-5)

    # 3) Streamed-weight path with a ragged hidden dim (H=192, th=128 -> the
    #    last H chunk is masked in-kernel), f32 accumulate directly into out.
    hidden_size2 = 192
    w1b, b1b, w2b, b2b = init_ffn_params(k_p2, embedding_size, hidden_size2)
    ref2 = jnp.maximum(x @ w1b + b1b, 0.0) @ w2b + b2b
    out2 = jax.block_until_ready(
        ffn_forward(x, w1b, b1b, w2b, b2b, compute_dtype=jnp.float32, th=128))
    assert jnp.allclose(out2, ref2, atol=1e-5, rtol=1e-5)

    print("KERNEL_OK")
</pallas_src>

<mosaic_0001>
module attributes {stable_mosaic.version = 11 : i64} {
  func.func @kernel(%arg0: i32, %arg1: i32, %arg2: memref<16x32xbf16, #tpu.memory_space<vmem>>, %arg3: memref<32x64xbf16, #tpu.memory_space<vmem>>, %arg4: memref<1x64xf32, #tpu.memory_space<vmem>>, %arg5: memref<64x32xbf16, #tpu.memory_space<vmem>>, %arg6: memref<1x32xf32, #tpu.memory_space<vmem>>, %arg7: memref<16x32xf32, #tpu.memory_space<vmem>>) attributes {dimension_semantics = [#tpu.dimension_semantics<parallel>, #tpu.dimension_semantics<arbitrary>], iteration_bounds = array<i64: 1, 1>, scalar_prefetch = 0 : i64, scratch_operands = 0 : i64, tpu.core_type = #tpu.core_type<tc>, window_params = [{transform_indices = @transform_0, window_bounds = array<i64: 16, 32>}, {pipeline_mode = #tpu.pipeline_mode<synchronous>, transform_indices = @transform_1, window_bounds = array<i64: 32, 64>}, {pipeline_mode = #tpu.pipeline_mode<synchronous>, transform_indices = @transform_2, window_bounds = array<i64: 1, 64>}, {pipeline_mode = #tpu.pipeline_mode<synchronous>, transform_indices = @transform_3, window_bounds = array<i64: 64, 32>}, {pipeline_mode = #tpu.pipeline_mode<synchronous>, transform_indices = @transform_4, window_bounds = array<i64: 1, 32>}, {transform_indices = @transform_5, window_bounds = array<i64: 16, 32>}]} {
    %c0 = arith.constant 0 : index
    %c0_0 = arith.constant 0 : index
    %0 = vector.load %arg2[%c0, %c0_0] : memref<16x32xbf16, #tpu.memory_space<vmem>>, vector<16x32xbf16>
    %c0_1 = arith.constant 0 : index
    %c0_2 = arith.constant 0 : index
    %1 = vector.load %arg3[%c0_1, %c0_2] : memref<32x64xbf16, #tpu.memory_space<vmem>>, vector<32x64xbf16>
    %cst = arith.constant dense<0.000000e+00> : vector<16x64xf32>
    %2 = tpu.matmul %0, %1, %cst {dimension_numbers = #tpu.dot_dimension_numbers<[1], [0], [0], [1], [0, 0, 1, 1], [], []>} : vector<16x32xbf16>, vector<32x64xbf16>, vector<16x64xf32> -> vector<16x64xf32>
    %c0_3 = arith.constant 0 : index
    %c0_4 = arith.constant 0 : index
    %3 = vector.load %arg4[%c0_3, %c0_4] : memref<1x64xf32, #tpu.memory_space<vmem>>, vector<1x64xf32>
    %4 = vector.broadcast %3 : vector<1x64xf32> to vector<16x64xf32>
    %5 = arith.addf %2, %4 : vector<16x64xf32>
    %cst_5 = arith.constant 0.000000e+00 : f32
    %6 = vector.broadcast %cst_5 : f32 to vector<16x64xf32>
    %7 = arith.maximumf %5, %6 : vector<16x64xf32>
    %c0_6 = arith.constant 0 : index
    %c0_7 = arith.constant 0 : index
    %8 = vector.load %arg5[%c0_6, %c0_7] : memref<64x32xbf16, #tpu.memory_space<vmem>>, vector<64x32xbf16>
    %9 = arith.truncf %7 : vector<16x64xf32> to vector<16x64xbf16>
    %cst_8 = arith.constant dense<0.000000e+00> : vector<16x32xf32>
    %10 = tpu.matmul %9, %8, %cst_8 {dimension_numbers = #tpu.dot_dimension_numbers<[1], [0], [0], [1], [0, 0, 1, 1], [], []>} : vector<16x64xbf16>, vector<64x32xbf16>, vector<16x32xf32> -> vector<16x32xf32>
    %c0_9 = arith.constant 0 : index
    %c0_10 = arith.constant 0 : index
    %11 = vector.load %arg6[%c0_9, %c0_10] : memref<1x32xf32, #tpu.memory_space<vmem>>, vector<1x32xf32>
    %12 = vector.broadcast %11 : vector<1x32xf32> to vector<16x32xf32>
    %13 = arith.addf %10, %12 : vector<16x32xf32>
    %c0_11 = arith.constant 0 : index
    %c0_12 = arith.constant 0 : index
    %14 = vector.load %arg7[%c0_11, %c0_12] : memref<16x32xf32, #tpu.memory_space<vmem>>, vector<16x32xf32>
    tpu.vector_store %arg7[%c0_11, %c0_12], %13 {strides = array<i32>} : memref<16x32xf32, #tpu.memory_space<vmem>>, vector<16x32xf32>,
    return
  }
  func.func @transform_0(%arg0: i32, %arg1: i32) -> (i32, i32) {
    %c0_i32 = arith.constant 0 : i32
    %c0_i32_0 = arith.constant 0 : i32
    return %arg0, %c0_i32 : i32, i32
  }
  func.func @transform_1(%arg0: i32, %arg1: i32) -> (i32, i32) {
    %c0_i32 = arith.constant 0 : i32
    %c0_i32_0 = arith.constant 0 : i32
    return %c0_i32, %arg1 : i32, i32
  }
  func.func @transform_2(%arg0: i32, %arg1: i32) -> (i32, i32) {
    %c0_i32 = arith.constant 0 : i32
    %c0_i32_0 = arith.constant 0 : i32
    return %c0_i32, %arg1 : i32, i32
  }
  func.func @transform_3(%arg0: i32, %arg1: i32) -> (i32, i32) {
    %c0_i32 = arith.constant 0 : i32
    %c0_i32_0 = arith.constant 0 : i32
    return %arg1, %c0_i32 : i32, i32
  }
  func.func @transform_4(%arg0: i32, %arg1: i32) -> (i32, i32) {
    %c0_i32 = arith.constant 0 : i32
    %c0_i32_0 = arith.constant 0 : i32
    %c0_i32_1 = arith.constant 0 : i32
    return %c0_i32, %c0_i32_0 : i32, i32
  }
  func.func @transform_5(%arg0: i32, %arg1: i32) -> (i32, i32) {
    %c0_i32 = arith.constant 0 : i32
    %c0_i32_0 = arith.constant 0 : i32
    return %arg0, %c0_i32 : i32, i32
  }
}

</mosaic_0001>

<llo_original>
// kernel: tpu_custom_call.1
$region0: #{tpu_custom_call.1}
  #allocation0 [shape = 'u32[]', space=smem, size = 0x4, offset = 0x4, fixed_abs, tag = 'smem constant byte address 0x4 - core index']
  #allocation1 [shape = 'u32[72,128]{1,0:T(1,128)}', space=vmem, size = 0x9000, scoped, tag = 'internal scratch']
  %s0 = inlined_call_operand.vmem [shape: bf16[16,32], index: 0, kind: input, shape index: {}]
  %s1 = inlined_call_operand.vmem [shape: bf16[32,64], index: 1, kind: input, shape index: {}]
  %s2 = inlined_call_operand.vmem [shape: f32[1,64], index: 2, kind: input, shape index: {}]
  %s3 = inlined_call_operand.vmem [shape: bf16[64,32], index: 3, kind: input, shape index: {}]
  %s4 = inlined_call_operand.vmem [shape: f32[1,32], index: 4, kind: input, shape index: {}]
  %s5 = inlined_call_operand.hbm [shape: f32[16,32], index: 5, kind: output, shape index: {}]
  %s6 = sld [smem:[#allocation0]]
  $region30: #{tpu_custom_call.1} parent=0
    _
  %s8 = ssub.s32 1, %s6
  %s9 = scalar_select 0, %s8, %s6
  $region1: #{tpu_custom_call.1} parent=0
    #allocation2 [shape = 'u8[8192]{0}', space=vmem, size = 0x2000, scoped, tag = 'output window, operand 0, single buffered']
    #allocation3 [shape = 's32[1]{0}', space=sflag, size = 0x4, scoped, tag = 'scoped memory for tpu_custom_call.1']
    %10 = vsyncpa [#allocation3], 0
    // Predicated region
    $region2: #{tpu_custom_call.1} parent=1 // pred_check
      _
    $region3: #{tpu_custom_call.1} parent=1 // pred_check_branch
      %12 = sbr.rel (0) target = $region5
    $region4: #{tpu_custom_call.1} parent=1 // pred_region
      _
    $region5: #{tpu_custom_call.1} parent=1 // pred_fallthru
      _
    // Predicated region
    $region6: #{tpu_custom_call.1} parent=1 // pred_check
      _
    $region7: #{tpu_custom_call.1} parent=1 // pred_check_branch
      %14 = sbr.rel (0) target = $region9
    $region8: #{tpu_custom_call.1} parent=1 // pred_region
      _
    $region9: #{tpu_custom_call.1} parent=1 // pred_fallthru
      _
    // Predicated region
    $region10: #{tpu_custom_call.1} parent=1 // pred_check
      _
    $region11: #{tpu_custom_call.1} parent=1 // pred_check_branch
      %16 = sbr.rel (0) target = $region13
    $region12: #{tpu_custom_call.1} parent=1 // pred_region
      _
    $region13: #{tpu_custom_call.1} parent=1 // pred_fallthru
      _
    // Predicated region
    $region14: #{tpu_custom_call.1} parent=1 // pred_check
      _
    $region15: #{tpu_custom_call.1} parent=1 // pred_check_branch
      %18 = sbr.rel (0) target = $region17
    $region16: #{tpu_custom_call.1} parent=1 // pred_region
      _
    $region17: #{tpu_custom_call.1} parent=1 // pred_fallthru
      _
    // Predicated region
    $region18: #{tpu_custom_call.1} parent=1 // pred_check
      _
    $region19: #{tpu_custom_call.1} parent=1 // pred_check_branch
      %20 = sbr.rel (0) target = $region21
    $region20: #{tpu_custom_call.1} parent=1 // pred_region
      _
    $region21: #{tpu_custom_call.1} parent=1 // pred_fallthru
      _
    %v22 = vld [vmem:[%s0] sm:$0xf]
    %v23 = vld [vmem:[%s0 + $0x4] sm:$0xf]
    %v24 = vld [vmem:[%s1] sm:$0xf]
    %v25 = vld [vmem:[%s1 + $0x4] sm:$0xf]
    %v26 = vld [vmem:[%s1 + $0x8] sm:$0xf]
    %v27 = vld [vmem:[%s1 + $0xc] sm:$0xf]
    %v28 = vld [vmem:[%s2] sm:$0x1]
    %v30 = vperm.slane %v28, 0
    %v34 = vunpack.c.l.b16 %v22
    %v35 = vunpack.c.l.b16 %v23
    %v36 = vpack.c.b16 %v35, %v34
    %v41 = vunpack.c.l.b16 %v24
    %v42 = vunpack.c.l.b16 %v25
    %v43 = vunpack.c.l.b16 %v26
    %v44 = vunpack.c.l.b16 %v27
    %v45 = vpack.c.b16 %v42, %v41
    %v46 = vpack.c.b16 %v44, %v43
    %vm49 = vcmask 261120
    %v51 = vsel %vm49, %v36, 0
    %53 = vmatpush.bf16.msra.mxu0 0
    %54 = vmatpush.bf16.msra.mxu0 0
    %55 = vmatpush.bf16.msra.mxu0 0
    %56 = vmatpush.bf16.msra.mxu0 0
    %57 = vmatpush.bf16.msra.mxu0 0
    %58 = vmatpush.bf16.msra.mxu0 0
    %59 = vmatpush.bf16.msra.mxu0 %v46
    %60 = vmatpush.bf16.msra.mxu0 %v45
    %61 = vmatmul.bf16.gmra.mxu0 %v51
    %v62 = vpop.f32.mrf.mxu0
    %v63 = vadd.f32 %v30, %v62
    %v64 = vpop.f32.mrf.mxu0
    %v65 = vadd.f32 %v30, %v64
    %66 = vdwg.mxu0
    %v67 = vmax.f32 %v63, 0.0
    %v68 = vmax.f32 %v65, 0.0
    %v69 = vld [vmem:[%s3] sm:$0xf]
    %v70 = vld [vmem:[%s3 + $0x4] sm:$0xf]
    %v71 = vld [vmem:[%s3 + $0x8] sm:$0xf]
    %v72 = vld [vmem:[%s3 + $0xc] sm:$0xf]
    %v73 = vld [vmem:[%s3 + $0x10] sm:$0xf]
    %v74 = vld [vmem:[%s3 + $0x14] sm:$0xf]
    %v75 = vld [vmem:[%s3 + $0x18] sm:$0xf]
    %v76 = vld [vmem:[%s3 + $0x1c] sm:$0xf]
    %v77 = vpack.c.bf16 %v68, %v67
    %v78 = vld [vmem:[%s4] sm:$0x1]
    %v80 = vperm.slane %v78, 0
    %v90 = vunpack.c.l.b16 %v69
    %v91 = vunpack.c.l.b16 %v70
    %v92 = vunpack.c.l.b16 %v71
    %v93 = vunpack.c.l.b16 %v72
    %v94 = vunpack.c.l.b16 %v73
    %v95 = vunpack.c.l.b16 %v74
    %v96 = vunpack.c.l.b16 %v75
    %v97 = vunpack.c.l.b16 %v76
    %v98 = vpack.c.b16 %v91, %v90
    %v99 = vpack.c.b16 %v93, %v92
    %v100 = vpack.c.b16 %v95, %v94
    %v101 = vpack.c.b16 %v97, %v96
    %vm106 = vcmask 523264
    %v108 = vsel %vm106, %v77, 0
    %110 = vmatpush.bf16.msra.mxu0 0
    %111 = vmatpush.bf16.msra.mxu0 0
    %112 = vmatpush.bf16.msra.mxu0 0
    %113 = vmatpush.bf16.msra.mxu0 0
    %114 = vmatpush.bf16.msra.mxu0 %v101
    %115 = vmatpush.bf16.msra.mxu0 %v100
    %116 = vmatpush.bf16.msra.mxu0 %v99
    %117 = vmatpush.bf16.msra.mxu0 %v98
    %118 = vmatmul.bf16.gmra.mxu0 %v108
    %v119 = vpop.f32.mrf.mxu0
    %v120 = vadd.f32 %v80, %v119
    %v121 = vpop.f32.mrf.mxu0
    %v122 = vadd.f32 %v80, %v121
    %123 = vdwg.mxu0
    %124 = vst.msk [vmem:[#allocation2] sm:$0xff] %vm49, %v120
    %125 = vst.msk [vmem:[#allocation2 + $0x8] sm:$0xff] %vm49, %v122
    // Predicated region
    $region22: #{tpu_custom_call.1} parent=1 // pred_check
      _
    $region23: #{tpu_custom_call.1} parent=1 // pred_check_branch
      %127 = sbr.rel (0) target = $region25
    $region24: #{tpu_custom_call.1} parent=1 // pred_region
      %129 = vsyncadd [#allocation3], 0
      %s130 = sshll.u32 [#allocation2], 4
      %s131 = int_to_ptr.vmem [resolvable:$true] %s130
      %s132 = sshll.u32 %s5, 4
      %s133 = int_to_ptr.hbm [resolvable:$true] %s132
      %138 = dma.vmem_to_hbm [thread:$0]  %s131, 256, %s133, [#allocation3], 128, 128, 8
    $region25: #{tpu_custom_call.1} parent=1 // pred_fallthru
      _
    // Predicated region
    $region26: #{tpu_custom_call.1} parent=1 // pred_check
      _
    $region27: #{tpu_custom_call.1} parent=1 // pred_check_branch
      %140 = sbr.rel (0) target = $region29
    $region28: #{tpu_custom_call.1} parent=1 // pred_region
      %142 = dma.done [#allocation3], 256
    $region29: #{tpu_custom_call.1} parent=1 // pred_fallthru
      _
    %143 = vsyncpa [#allocation3], 1

</llo_original>
